<compile_context>
chip_gen: v6e
topology: v6e:2x2x1
jax: 0.10.0
libtpu: 0.0.40
codegen_flags: <defaults>
</compile_context>

<pallas_src>
import functools

import numpy as np
import jax
import jax.numpy as jnp
from jax.experimental import pallas as pl
from jax.experimental.pallas import tpu as pltpu


def _round_up(x, m):
    return (x + m - 1) // m * m


def _patch_merging_kernel(x_ref, gamma_ref, beta_ref, w_ref, b_ref, o_ref, *, eps):
    """Fused LayerNorm(4C) + Linear(4C -> 2C) on one row tile.

    x_ref     : (TR, F)    merged-patch features (F = 4*C), input dtype
    gamma_ref : (1, F)     LayerNorm weight (f32)
    beta_ref  : (1, F)     LayerNorm bias   (f32)
    w_ref     : (F, OUT)   projection weight, transposed for x @ W, bf16
    b_ref     : (1, OUT)   projection bias  (f32)
    o_ref     : (TR, OUT)  output tile
    """
    x = x_ref[...].astype(jnp.float32)                       # (TR, F)

    # LayerNorm over the feature axis -- f32 statistics, biased variance
    # (matches torch.nn.LayerNorm).  rsqrt goes to the EUP slot.
    mean = jnp.mean(x, axis=-1, keepdims=True)
    xc = x - mean
    var = jnp.mean(xc * xc, axis=-1, keepdims=True)
    xn = xc * jax.lax.rsqrt(var + eps)
    xn = xn * gamma_ref[...] + beta_ref[...]                  # (TR, F)

    # Projection on the MXU: bf16 operands, f32 accumulation.
    y = jnp.dot(xn.astype(jnp.bfloat16), w_ref[...],
                preferred_element_type=jnp.float32)           # (TR, OUT)
    y = y + b_ref[...]
    o_ref[...] = y.astype(o_ref.dtype)


def _merge_patches(x, H, W):
    """Literal port of the PyTorch rearrangement (including the channel-0
    indexing `x[:, 0::2, 0::2, 0]` of the reference implementation)."""
    B, L, C = x.shape
    assert L == H * W, "input feature size wrong"
    x = x.reshape(B, H, W, C)
    if (H % 2) or (W % 2):
        x = jnp.pad(x, ((0, 0), (0, H % 2), (0, W % 2), (0, 0)))
    x0 = x[:, 0::2, 0::2, 0]
    x1 = x[:, 1::2, 0::2, 0]
    x2 = x[:, 0::2, 1::2, 0]
    x3 = x[:, 1::2, 1::2, 0]
    x = jnp.concatenate([x0, x1, x2, x3], axis=-1)            # (B, Hp/2, 2*Wp)
    total = x.shape[1] * x.shape[2]
    assert total % (4 * C) == 0, "input feature size wrong"
    return x.reshape(B, total // (4 * C), 4 * C)              # (B, M, 4C)


def patch_merging_pallas(x, H, W, gamma, beta, proj_w, proj_b,
                         *, eps=1e-5, row_tile=256):
    """x: (B, H*W, C); gamma/beta: (4C,); proj_w: (4C, 2C) (x @ W layout);
    proj_b: (2C,).  Returns (B, M, 2C) with M = Hp*Wp / (4C)."""
    # Patch rearrangement: pure data movement, kept in XLA glue.
    xm = _merge_patches(x, H, W)                              # (B, M, F)
    B, M, F = xm.shape
    OUT = proj_w.shape[1]

    # Flatten to a lane-dense 2D slab and tile the row axis so every grid step
    # does a (TR, F) x (F, OUT) matmul -- fuses many "windows" per step.
    R = B * M
    xf = xm.reshape(R, F)
    TR = min(row_tile, _round_up(R, 8))
    R_pad = _round_up(R, TR)
    if R_pad != R:
        xf = jnp.pad(xf, ((0, R_pad - R), (0, 0)))            # zero rows, dropped later

    grid = (R_pad // TR,)

    # NOTE: the weight/bias blocks have constant index maps; for real Swin dims
    # (C up to 1024) on v7x, additionally mark them pl.Buffered(1) and set
    # vmem_limit_bytes so they are not double-buffered inside 64 MiB VMEM.
    out = pl.pallas_call(
        functools.partial(_patch_merging_kernel, eps=eps),
        out_shape=jax.ShapeDtypeStruct((R_pad, OUT), x.dtype),
        grid_spec=pltpu.PrefetchScalarGridSpec(
            num_scalar_prefetch=0,
            grid=grid,
            in_specs=[
                pl.BlockSpec((TR, F), lambda r: (r, 0)),      # merged features
                pl.BlockSpec((1, F), lambda r: (0, 0)),       # LN gamma
                pl.BlockSpec((1, F), lambda r: (0, 0)),       # LN beta
                pl.BlockSpec((F, OUT), lambda r: (0, 0)),     # proj weight (bf16)
                pl.BlockSpec((1, OUT), lambda r: (0, 0)),     # proj bias
            ],
            out_specs=pl.BlockSpec((TR, OUT), lambda r: (r, 0)),
        ),
        compiler_params=pltpu.CompilerParams(
            dimension_semantics=("parallel",)),
    )(xf,
      gamma.reshape(1, F).astype(jnp.float32),
      beta.reshape(1, F).astype(jnp.float32),
      proj_w.astype(jnp.bfloat16),                            # MXU-native dtype
      proj_b.reshape(1, OUT).astype(jnp.float32))

    return out[:R].reshape(B, M, OUT)


def patch_merging_reference(x, H, W, gamma, beta, proj_w, proj_b, eps=1e-5):
    """Pure-JAX f32 reference reproducing the PyTorch forward semantics."""
    xm = _merge_patches(x, H, W)
    mean = jnp.mean(xm, axis=-1, keepdims=True)
    var = jnp.mean((xm - mean) ** 2, axis=-1, keepdims=True)
    xn = (xm - mean) / jnp.sqrt(var + eps) * gamma + beta
    return xn @ proj_w + proj_b


if __name__ == "__main__":
    # Small config: dim (C) = 4, H = W = 16, batch = 2  ->  x: (2, 256, 4).
    # (H*W = 256 is divisible by 4*C = 16, as the module's view() requires.)
    B, H, W, dim = 2, 16, 16, 4
    F = 4 * dim          # LayerNorm / proj input features
    OUT = 2 * dim        # proj output features

    key = jax.random.PRNGKey(0)
    k0, k1, k2, k3, k4 = jax.random.split(key, 5)

    x = jax.random.normal(k0, (B, H * W, dim), jnp.float32)
    gamma = 1.0 + 0.1 * jax.random.normal(k1, (F,), jnp.float32)
    beta = 0.1 * jax.random.normal(k2, (F,), jnp.float32)
    # Linear weight stored transposed for y = x @ W + b.
    proj_w = 0.1 * jax.random.normal(k3, (F, OUT), jnp.float32)
    proj_b = 0.1 * jax.random.normal(k4, (OUT,), jnp.float32)

    out = patch_merging_pallas(x, H, W, gamma, beta, proj_w, proj_b)
    out = jax.block_until_ready(out)

    ref = patch_merging_reference(x, H, W, gamma, beta, proj_w, proj_b)
    np.testing.assert_allclose(np.asarray(out), np.asarray(ref),
                               rtol=2e-2, atol=2e-2)
    print("KERNEL_OK")
</pallas_src>

<mosaic_0001>
module attributes {stable_mosaic.version = 11 : i64} {
  func.func @_patch_merging_kernel(%arg0: i32, %arg1: memref<32x16xf32, #tpu.memory_space<vmem>>, %arg2: memref<1x16xf32, #tpu.memory_space<vmem>>, %arg3: memref<1x16xf32, #tpu.memory_space<vmem>>, %arg4: memref<16x8xbf16, #tpu.memory_space<vmem>>, %arg5: memref<1x8xf32, #tpu.memory_space<vmem>>, %arg6: memref<32x8xf32, #tpu.memory_space<vmem>>) attributes {dimension_semantics = [#tpu.dimension_semantics<parallel>], iteration_bounds = array<i64: 1>, scalar_prefetch = 0 : i64, scratch_operands = 0 : i64, tpu.core_type = #tpu.core_type<tc>, window_params = [{transform_indices = @transform_0, window_bounds = array<i64: 32, 16>}, {pipeline_mode = #tpu.pipeline_mode<synchronous>, transform_indices = @transform_1, window_bounds = array<i64: 1, 16>}, {pipeline_mode = #tpu.pipeline_mode<synchronous>, transform_indices = @transform_2, window_bounds = array<i64: 1, 16>}, {pipeline_mode = #tpu.pipeline_mode<synchronous>, transform_indices = @transform_3, window_bounds = array<i64: 16, 8>}, {pipeline_mode = #tpu.pipeline_mode<synchronous>, transform_indices = @transform_4, window_bounds = array<i64: 1, 8>}, {transform_indices = @transform_5, window_bounds = array<i64: 32, 8>}]} {
    %c0 = arith.constant 0 : index
    %c0_0 = arith.constant 0 : index
    %0 = vector.load %arg1[%c0, %c0_0] : memref<32x16xf32, #tpu.memory_space<vmem>>, vector<32x16xf32>
    %cst = arith.constant dense<0.000000e+00> : vector<32xf32>
    %1 = vector.multi_reduction <add>, %0, %cst [1] : vector<32x16xf32> to vector<32xf32>
    %2 = vector.shape_cast %1 : vector<32xf32> to vector<32x1xf32>
    %cst_1 = arith.constant 1.600000e+01 : f32
    %3 = vector.broadcast %cst_1 : f32 to vector<32x1xf32>
    %4 = arith.divf %2, %3 : vector<32x1xf32>
    %5 = vector.broadcast %4 : vector<32x1xf32> to vector<32x16xf32>
    %6 = arith.subf %0, %5 : vector<32x16xf32>
    %7 = arith.mulf %6, %6 : vector<32x16xf32>
    %cst_2 = arith.constant dense<0.000000e+00> : vector<32xf32>
    %8 = vector.multi_reduction <add>, %7, %cst_2 [1] : vector<32x16xf32> to vector<32xf32>
    %9 = vector.shape_cast %8 : vector<32xf32> to vector<32x1xf32>
    %cst_3 = arith.constant 1.600000e+01 : f32
    %10 = vector.broadcast %cst_3 : f32 to vector<32x1xf32>
    %11 = arith.divf %9, %10 : vector<32x1xf32>
    %cst_4 = arith.constant 9.99999974E-6 : f32
    %12 = vector.broadcast %cst_4 : f32 to vector<32x1xf32>
    %13 = arith.addf %11, %12 : vector<32x1xf32>
    %14 = math.rsqrt %13 : vector<32x1xf32>
    %15 = vector.broadcast %14 : vector<32x1xf32> to vector<32x16xf32>
    %16 = arith.mulf %6, %15 : vector<32x16xf32>
    %c0_5 = arith.constant 0 : index
    %c0_6 = arith.constant 0 : index
    %17 = vector.load %arg2[%c0_5, %c0_6] : memref<1x16xf32, #tpu.memory_space<vmem>>, vector<1x16xf32>
    %18 = vector.broadcast %17 : vector<1x16xf32> to vector<32x16xf32>
    %19 = arith.mulf %16, %18 : vector<32x16xf32>
    %c0_7 = arith.constant 0 : index
    %c0_8 = arith.constant 0 : index
    %20 = vector.load %arg3[%c0_7, %c0_8] : memref<1x16xf32, #tpu.memory_space<vmem>>, vector<1x16xf32>
    %21 = vector.broadcast %20 : vector<1x16xf32> to vector<32x16xf32>
    %22 = arith.addf %19, %21 : vector<32x16xf32>
    %23 = arith.truncf %22 : vector<32x16xf32> to vector<32x16xbf16>
    %c0_9 = arith.constant 0 : index
    %c0_10 = arith.constant 0 : index
    %24 = vector.load %arg4[%c0_9, %c0_10] : memref<16x8xbf16, #tpu.memory_space<vmem>>, vector<16x8xbf16>
    %cst_11 = arith.constant dense<0.000000e+00> : vector<32x8xf32>
    %25 = tpu.matmul %23, %24, %cst_11 {dimension_numbers = #tpu.dot_dimension_numbers<[1], [0], [0], [1], [0, 0, 1, 1], [], []>} : vector<32x16xbf16>, vector<16x8xbf16>, vector<32x8xf32> -> vector<32x8xf32>
    %c0_12 = arith.constant 0 : index
    %c0_13 = arith.constant 0 : index
    %26 = vector.load %arg5[%c0_12, %c0_13] : memref<1x8xf32, #tpu.memory_space<vmem>>, vector<1x8xf32>
    %27 = vector.broadcast %26 : vector<1x8xf32> to vector<32x8xf32>
    %28 = arith.addf %25, %27 : vector<32x8xf32>
    %c0_14 = arith.constant 0 : index
    %c0_15 = arith.constant 0 : index
    %29 = vector.load %arg6[%c0_14, %c0_15] : memref<32x8xf32, #tpu.memory_space<vmem>>, vector<32x8xf32>
    tpu.vector_store %arg6[%c0_14, %c0_15], %28 {strides = array<i32>} : memref<32x8xf32, #tpu.memory_space<vmem>>, vector<32x8xf32>,
    return
  }
  func.func @transform_0(%arg0: i32) -> (i32, i32) {
    %c0_i32 = arith.constant 0 : i32
    %c0_i32_0 = arith.constant 0 : i32
    return %arg0, %c0_i32 : i32, i32
  }
  func.func @transform_1(%arg0: i32) -> (i32, i32) {
    %c0_i32 = arith.constant 0 : i32
    %c0_i32_0 = arith.constant 0 : i32
    %c0_i32_1 = arith.constant 0 : i32
    return %c0_i32, %c0_i32_0 : i32, i32
  }
  func.func @transform_2(%arg0: i32) -> (i32, i32) {
    %c0_i32 = arith.constant 0 : i32
    %c0_i32_0 = arith.constant 0 : i32
    %c0_i32_1 = arith.constant 0 : i32
    return %c0_i32, %c0_i32_0 : i32, i32
  }
  func.func @transform_3(%arg0: i32) -> (i32, i32) {
    %c0_i32 = arith.constant 0 : i32
    %c0_i32_0 = arith.constant 0 : i32
    %c0_i32_1 = arith.constant 0 : i32
    return %c0_i32, %c0_i32_0 : i32, i32
  }
  func.func @transform_4(%arg0: i32) -> (i32, i32) {
    %c0_i32 = arith.constant 0 : i32
    %c0_i32_0 = arith.constant 0 : i32
    %c0_i32_1 = arith.constant 0 : i32
    return %c0_i32, %c0_i32_0 : i32, i32
  }
  func.func @transform_5(%arg0: i32) -> (i32, i32) {
    %c0_i32 = arith.constant 0 : i32
    %c0_i32_0 = arith.constant 0 : i32
    return %arg0, %c0_i32 : i32, i32
  }
}

</mosaic_0001>

<llo_original>
// kernel: tpu_custom_call.1
$region0: #{tpu_custom_call.1}
  #allocation0 [shape = 'u32[]', space=smem, size = 0x4, offset = 0x4, fixed_abs, tag = 'smem constant byte address 0x4 - core index']
  #allocation1 [shape = 'u32[144,128]{1,0:T(1,128)}', space=vmem, size = 0x12000, scoped, tag = 'internal scratch']
  %s0 = inlined_call_operand.vmem [shape: f32[32,16], index: 0, kind: input, shape index: {}]
  %s1 = inlined_call_operand.vmem [shape: f32[1,16], index: 1, kind: input, shape index: {}]
  %s2 = inlined_call_operand.vmem [shape: f32[1,16], index: 2, kind: input, shape index: {}]
  %s3 = inlined_call_operand.vmem [shape: bf16[16,8], index: 3, kind: input, shape index: {}]
  %s4 = inlined_call_operand.vmem [shape: f32[1,8], index: 4, kind: input, shape index: {}]
  %s5 = inlined_call_operand.vmem [shape: f32[32,8], index: 5, kind: output, shape index: {}]
  %s6 = sld [smem:[#allocation0]]
  $region30: #{tpu_custom_call.1} parent=0
    _
  %s8 = ssub.s32 1, %s6
  %s9 = scalar_select 0, %s8, %s6
  // Predicated region
  $region2: #{tpu_custom_call.1} parent=0 // pred_check
    _
  $region3: #{tpu_custom_call.1} parent=0 // pred_check_branch
    %11 = sbr.rel (0) target = $region5
  $region4: #{tpu_custom_call.1} parent=0 // pred_region
    _
  $region5: #{tpu_custom_call.1} parent=0 // pred_fallthru
    _
  // Predicated region
  $region6: #{tpu_custom_call.1} parent=0 // pred_check
    _
  $region7: #{tpu_custom_call.1} parent=0 // pred_check_branch
    %13 = sbr.rel (0) target = $region9
  $region8: #{tpu_custom_call.1} parent=0 // pred_region
    _
  $region9: #{tpu_custom_call.1} parent=0 // pred_fallthru
    _
  // Predicated region
  $region10: #{tpu_custom_call.1} parent=0 // pred_check
    _
  $region11: #{tpu_custom_call.1} parent=0 // pred_check_branch
    %15 = sbr.rel (0) target = $region13
  $region12: #{tpu_custom_call.1} parent=0 // pred_region
    _
  $region13: #{tpu_custom_call.1} parent=0 // pred_fallthru
    _
  // Predicated region
  $region14: #{tpu_custom_call.1} parent=0 // pred_check
    _
  $region15: #{tpu_custom_call.1} parent=0 // pred_check_branch
    %17 = sbr.rel (0) target = $region17
  $region16: #{tpu_custom_call.1} parent=0 // pred_region
    _
  $region17: #{tpu_custom_call.1} parent=0 // pred_fallthru
    _
  // Predicated region
  $region18: #{tpu_custom_call.1} parent=0 // pred_check
    _
  $region19: #{tpu_custom_call.1} parent=0 // pred_check_branch
    %19 = sbr.rel (0) target = $region21
  $region20: #{tpu_custom_call.1} parent=0 // pred_region
    _
  $region21: #{tpu_custom_call.1} parent=0 // pred_fallthru
    _
  %v21 = vld [vmem:[%s0] sm:$0xff]
  %v22 = vld [vmem:[%s0 + $0x8] sm:$0xff]
  %v23 = vld [vmem:[%s0 + $0x10] sm:$0xff]
  %v24 = vld [vmem:[%s0 + $0x18] sm:$0xff]
  %vm25 = vcmask 130048
  %v26 = vsel %vm25, %v21, 0.0
  %27 = vadd.xlane.f32.xlu0 %v26
  %v28 = vpop.xlane.xlu0 %27
  %v29 = vsel %vm25, %v22, 0.0
  %30 = vadd.xlane.f32.xlu0 %v29
  %v31 = vpop.xlane.xlu0 %30
  %v32 = vsel %vm25, %v23, 0.0
  %33 = vadd.xlane.f32.xlu0 %v32
  %v34 = vpop.xlane.xlu0 %33
  %v35 = vsel %vm25, %v24, 0.0
  %36 = vadd.xlane.f32.xlu0 %v35
  %v37 = vpop.xlane.xlu0 %36
  %v38 = vrcp.pop 16.0
  %v39 = vmul.f32 %v28, %v38
  %v40 = vmul.f32 %v31, %v38
  %v41 = vmul.f32 %v34, %v38
  %v42 = vmul.f32 %v37, %v38
  %v43 = vsub.f32 %v21, %v39
  %v44 = vsub.f32 %v22, %v40
  %v45 = vsub.f32 %v23, %v41
  %v46 = vsub.f32 %v24, %v42
  %v47 = vmul.f32 %v43, %v43
  %v48 = vmul.f32 %v44, %v44
  %v49 = vmul.f32 %v45, %v45
  %v50 = vmul.f32 %v46, %v46
  %v51 = vsel %vm25, %v47, 0.0
  %52 = vadd.xlane.f32.xlu0 %v51
  %v53 = vpop.xlane.xlu0 %52
  %v54 = vsel %vm25, %v48, 0.0
  %55 = vadd.xlane.f32.xlu0 %v54
  %v56 = vpop.xlane.xlu0 %55
  %v57 = vsel %vm25, %v49, 0.0
  %58 = vadd.xlane.f32.xlu0 %v57
  %v59 = vpop.xlane.xlu0 %58
  %v60 = vsel %vm25, %v50, 0.0
  %61 = vadd.xlane.f32.xlu0 %v60
  %v62 = vpop.xlane.xlu0 %61
  %v63 = vmul.f32 %v53, %v38
  %v64 = vmul.f32 %v56, %v38
  %v65 = vmul.f32 %v59, %v38
  %v66 = vmul.f32 %v62, %v38
  %v67 = vadd.f32 %v63, 1e-05
  %v68 = vadd.f32 %v64, 1e-05
  %v69 = vadd.f32 %v65, 1e-05
  %v70 = vadd.f32 %v66, 1e-05
  %v71 = vrsqrt.pop %v67
  %v72 = vrsqrt.pop %v68
  %v73 = vrsqrt.pop %v69
  %v74 = vrsqrt.pop %v70
  %v75 = vmul.f32 %v43, %v71
  %v76 = vmul.f32 %v44, %v72
  %v77 = vmul.f32 %v45, %v73
  %v78 = vmul.f32 %v46, %v74
  %v79 = vld [vmem:[%s1] sm:$0x1]
  %v81 = vlaneseq
  %v82 = vshrl.u32 %v81, 7
  %v83 = vsub.s32 0, %v82
  %v84 = vrot.slane %v79, %v83
  %v86 = vmul.f32 %v75, %v84
  %v87 = vmul.f32 %v76, %v84
  %v88 = vmul.f32 %v77, %v84
  %v89 = vmul.f32 %v78, %v84
  %v90 = vld [vmem:[%s2] sm:$0x1]
  %v92 = vlaneseq
  %v93 = vshrl.u32 %v92, 7
  %v94 = vsub.s32 0, %v93
  %v95 = vrot.slane %v90, %v94
  %v97 = vadd.f32 %v86, %v95
  %v98 = vadd.f32 %v87, %v95
  %v99 = vadd.f32 %v88, %v95
  %v100 = vadd.f32 %v89, %v95
  %v101 = vpack.c.bf16 %v98, %v97
  %v102 = vpack.c.bf16 %v100, %v99
  %v103 = vld [vmem:[%s3] sm:$0xf]
  %v104 = vld [vmem:[%s3 + $0x4] sm:$0xf]
  %v105 = vld [vmem:[%s4] sm:$0x1]
  %v107 = vlaneseq
  %v108 = vshrl.u32 %v107, 7
  %v109 = vsub.s32 0, %v108
  %v110 = vrot.slane %v105, %v109
  %v114 = vunpack.c.l.b16 %v103
  %v115 = vunpack.c.l.b16 %v104
  %v116 = vpack.c.b16 %v115, %v114
  %v119 = vsel %vm25, %v101, 0
  %v122 = vsel %vm25, %v102, 0
  %124 = vmatprep.subr.bf16.mxu0 0
  %125 = vmatpush1.bf16.msra.mxu0 0
  %126 = vmatprep.subr.bf16.mxu0 0
  %127 = vmatpush1.bf16.msra.mxu0 0
  %128 = vmatprep.subr.bf16.mxu0 0
  %129 = vmatpush1.bf16.msra.mxu0 0
  %130 = vmatprep.subr.bf16.mxu0 0
  %131 = vmatpush1.bf16.msra.mxu0 0
  %132 = vmatprep.subr.bf16.mxu0 0
  %133 = vmatpush1.bf16.msra.mxu0 0
  %134 = vmatprep.subr.bf16.mxu0 0
  %135 = vmatpush1.bf16.msra.mxu0 0
  %136 = vmatprep.subr.bf16.mxu0 0
  %137 = vmatpush1.bf16.msra.mxu0 0
  %138 = vmatprep.subr.bf16.mxu0 0
  %139 = vmatpush1.bf16.msra.mxu0 %v116
  %140 = vmatprep.subr.bf16.mxu0 0
  %141 = vmatpush2.bf16.msra.mxu0 0
  %142 = vmatprep.subr.bf16.mxu0 0
  %143 = vmatpush2.bf16.msra.mxu0 0
  %144 = vmatprep.subr.bf16.mxu0 0
  %145 = vmatpush2.bf16.msra.mxu0 0
  %146 = vmatprep.subr.bf16.mxu0 0
  %147 = vmatpush2.bf16.msra.mxu0 0
  %148 = vmatprep.subr.bf16.mxu0 0
  %149 = vmatpush2.bf16.msra.mxu0 0
  %150 = vmatprep.subr.bf16.mxu0 0
  %151 = vmatpush2.bf16.msra.mxu0 0
  %152 = vmatprep.subr.bf16.mxu0 0
  %153 = vmatpush2.bf16.msra.mxu0 0
  %154 = vmatprep.subr.bf16.mxu0 0
  %155 = vmatpush2.bf16.msra.mxu0 0
  %156 = vmatprep.mubr.bf16.mxu0 0
  %157 = vmatmul.mubr.bf16.gmra.mxu0 %v119
  %v158 = vpop.f32.mrf.mxu0
  %v159 = vadd.f32 %v110, %v158
  %v160 = vpop.f32.mrf.mxu0
  %v161 = vpop.f32.mrf.mxu0
  %v162 = vadd.f32 %v110, %v161
  %v163 = vpop.f32.mrf.mxu0
  %164 = vmatprep.mubr.bf16.mxu0 0
  %165 = vmatmul.mubr.bf16.gmra.mxu0 %v122
  %v166 = vpop.f32.mrf.mxu0
  %v167 = vadd.f32 %v110, %v166
  %v168 = vpop.f32.mrf.mxu0
  %v169 = vpop.f32.mrf.mxu0
  %v170 = vadd.f32 %v110, %v169
  %v171 = vpop.f32.mrf.mxu0
  %172 = vdwg.mxu0
  %vm173 = vcmask 64512
  %174 = vst.msk [vmem:[%s5] sm:$0xff] %vm173, %v159
  %175 = vst.msk [vmem:[%s5 + $0x8] sm:$0xff] %vm173, %v162
  %176 = vst.msk [vmem:[%s5 + $0x10] sm:$0xff] %vm173, %v167
  %177 = vst.msk [vmem:[%s5 + $0x18] sm:$0xff] %vm173, %v170
  // Predicated region
  $region22: #{tpu_custom_call.1} parent=0 // pred_check
    _
  $region23: #{tpu_custom_call.1} parent=0 // pred_check_branch
    %179 = sbr.rel (0) target = $region25
  $region24: #{tpu_custom_call.1} parent=0 // pred_region
    _
  $region25: #{tpu_custom_call.1} parent=0 // pred_fallthru
    _
  // Predicated region
  $region26: #{tpu_custom_call.1} parent=0 // pred_check
    _
  $region27: #{tpu_custom_call.1} parent=0 // pred_check_branch
    %181 = sbr.rel (0) target = $region29
  $region28: #{tpu_custom_call.1} parent=0 // pred_region
    _
  $region29: #{tpu_custom_call.1} parent=0 // pred_fallthru
    _

</llo_original>
